<compile_context>
chip_gen: v7x
topology: tpu7x:2x2x1
jax: 0.10.0
libtpu: 0.0.40
codegen_flags: <defaults>
</compile_context>

<pallas_src>
import functools

import numpy as np
import jax
import jax.numpy as jnp
from jax import lax
from jax.experimental import pallas as pl
from jax.experimental.pallas import tpu as pltpu


def _naive_complex_bn2d_kernel(params_ref, xr_ref, xi_ref, or_ref, oi_ref,
                               *, eps, inv_count):
    """One grid step = one block of channels, full (N, HW) reduction plane.

    params_ref : (C_blk, 4) f32   columns = [gamma_r, beta_r, gamma_i, beta_i]
    xr/xi_ref  : (N, C_blk, HW)   inputs (native dtype), HW on lanes
    or/oi_ref  : (N, C_blk, HW)   outputs (native dtype)
    """
    p = params_ref[...]                                        # (C_blk, 4) f32
    c_blk = p.shape[0]
    for b, (x_ref, o_ref) in enumerate(((xr_ref, or_ref), (xi_ref, oi_ref))):
        gamma = p[:, 2 * b:2 * b + 1].reshape(1, c_blk, 1)     # (1, C_blk, 1)
        beta = p[:, 2 * b + 1:2 * b + 2].reshape(1, c_blk, 1)  # (1, C_blk, 1)

        x = x_ref[...].astype(jnp.float32)                     # in-kernel cast (VPU)
        # Per-channel mean over (N, HW): batch axis = plain vreg adds,
        # HW axis = XLU lane reduce.
        mean = jnp.sum(jnp.sum(x, axis=0, keepdims=True),
                       axis=2, keepdims=True) * inv_count      # (1, C_blk, 1)
        xc = x - mean
        # Biased variance (PyTorch uses biased variance for normalization).
        var = jnp.sum(jnp.sum(xc * xc, axis=0, keepdims=True),
                      axis=2, keepdims=True) * inv_count       # (1, C_blk, 1)
        scale = gamma * lax.rsqrt(var + eps)                   # EUP rsqrt
        o_ref[...] = (xc * scale + beta).astype(o_ref.dtype)   # one FMA/element


def _choose_channel_block(N, C, HW, itemsize, budget_bytes):
    """Largest legal channel block whose double-buffered working set fits budget."""
    # 2 inputs + 2 outputs per channel, double-buffered by the pipeline.
    bytes_per_channel = N * HW * itemsize * 4 * 2
    max_c = max(1, budget_bytes // bytes_per_channel)
    if C <= max_c:
        return C, C * bytes_per_channel
    # When blocking, C_blk must be a multiple of 8 (sublane-full + legal BlockSpec).
    c_blk = max(8, (max_c // 8) * 8)
    return c_blk, c_blk * bytes_per_channel


def naive_complex_batch_norm2d(x_r, x_i, gamma_r, beta_r, gamma_i, beta_i,
                               *, eps=1e-5):
    """x_*: (N, C, H, W) NCHW tensors; gamma_*/beta_*: (C,) affine params."""
    N, C, H, W = x_r.shape
    assert x_i.shape == (N, C, H, W)
    assert x_i.dtype == x_r.dtype
    HW = H * W
    dtype = x_r.dtype
    itemsize = jnp.dtype(dtype).itemsize

    # Pure reshapes only on the big tensors (no pad / transpose / dtype cast in
    # the wrapper): lane dim = H*W (dense when it is a multiple of 128).
    xr = x_r.reshape(N, C, HW)
    xi = x_i.reshape(N, C, HW)
    # Pack the four tiny affine vectors into ONE (C, 4) f32 operand.
    params = jnp.stack([gamma_r, beta_r, gamma_i, beta_i],
                       axis=1).astype(jnp.float32)             # (C, 4)

    # Channel-block sizing: keep the double-buffered working set <= ~24 MiB so
    # it fits comfortably under every generation's scoped/physical VMEM.
    budget = 24 * 1024 * 1024
    c_blk, working_bytes = _choose_channel_block(N, C, HW, itemsize, budget)
    grid = (pl.cdiv(C, c_blk),)
    vmem_limit = int(min(max(32 * 1024 * 1024, working_bytes + (2 << 20)),
                         56 * 1024 * 1024))

    kernel = functools.partial(_naive_complex_bn2d_kernel,
                               eps=float(eps), inv_count=1.0 / float(N * HW))

    x_spec = pl.BlockSpec((N, c_blk, HW), lambda c: (0, c, 0))
    p_spec = pl.BlockSpec((c_blk, 4), lambda c: (c, 0))

    out_r, out_i = pl.pallas_call(
        kernel,
        out_shape=(jax.ShapeDtypeStruct((N, C, HW), dtype),
                   jax.ShapeDtypeStruct((N, C, HW), dtype)),
        grid=grid,
        in_specs=[p_spec, x_spec, x_spec],
        out_specs=(x_spec, x_spec),
        compiler_params=pltpu.CompilerParams(
            # Per-channel stats are independent -> channel blocks shard across
            # both TensorCores on v7x; no effect (and harmless) on v5e/v6e.
            dimension_semantics=("parallel",),
            vmem_limit_bytes=vmem_limit),
    )(params, xr, xi)

    return out_r.reshape(N, C, H, W), out_i.reshape(N, C, H, W)


def _ref_bn2d_np(x, gamma, beta, eps):
    """Numpy reference of torch.nn.BatchNorm2d forward in training mode."""
    x = np.asarray(x, np.float64)
    gamma = np.asarray(gamma, np.float64)
    beta = np.asarray(beta, np.float64)
    mean = x.mean(axis=(0, 2, 3), keepdims=True)
    var = x.var(axis=(0, 2, 3), keepdims=True)          # biased variance
    xhat = (x - mean) / np.sqrt(var + eps)
    return xhat * gamma.reshape(1, -1, 1, 1) + beta.reshape(1, -1, 1, 1)


if __name__ == "__main__":
    # Small shapes consistent with the module: batch=2, channels=4, 16x16.
    N, C, H, W = 2, 4, 16, 16
    eps = 1e-5

    key = jax.random.PRNGKey(0)
    ks = jax.random.split(key, 6)
    x_r = jax.random.normal(ks[0], (N, C, H, W), jnp.float32) * 2.0 + 0.5
    x_i = jax.random.normal(ks[1], (N, C, H, W), jnp.float32) * 1.5 - 0.3
    # Non-trivial affine parameters to exercise the gamma/beta path.
    gamma_r = 1.0 + 0.1 * jax.random.normal(ks[2], (C,), jnp.float32)
    beta_r = 0.1 * jax.random.normal(ks[3], (C,), jnp.float32)
    gamma_i = 1.0 + 0.1 * jax.random.normal(ks[4], (C,), jnp.float32)
    beta_i = 0.1 * jax.random.normal(ks[5], (C,), jnp.float32)

    out_r, out_i = naive_complex_batch_norm2d(
        x_r, x_i, gamma_r, beta_r, gamma_i, beta_i, eps=eps)
    jax.block_until_ready((out_r, out_i))

    ref_r = _ref_bn2d_np(x_r, gamma_r, beta_r, eps)
    ref_i = _ref_bn2d_np(x_i, gamma_i, beta_i, eps)

    assert out_r.shape == (N, C, H, W)
    assert out_i.shape == (N, C, H, W)
    np.testing.assert_allclose(np.asarray(out_r), ref_r, rtol=1e-4, atol=1e-4)
    np.testing.assert_allclose(np.asarray(out_i), ref_i, rtol=1e-4, atol=1e-4)

    print("KERNEL_OK")
</pallas_src>

<mosaic_0001>
module attributes {stable_mosaic.version = 11 : i64} {
  func.func @_naive_complex_bn2d_kernel(%arg0: i32, %arg1: memref<4x4xf32, #tpu.memory_space<vmem>>, %arg2: memref<2x4x256xf32, #tpu.memory_space<vmem>>, %arg3: memref<2x4x256xf32, #tpu.memory_space<vmem>>, %arg4: memref<2x4x256xf32, #tpu.memory_space<vmem>>, %arg5: memref<2x4x256xf32, #tpu.memory_space<vmem>>) attributes {dimension_semantics = [#tpu.dimension_semantics<parallel>], iteration_bounds = array<i64: 1>, scalar_prefetch = 0 : i64, scratch_operands = 0 : i64, tpu.core_type = #tpu.core_type<tc>, window_params = [{transform_indices = @transform_0, window_bounds = array<i64: 4, 4>}, {transform_indices = @transform_1, window_bounds = array<i64: 2, 4, 256>}, {transform_indices = @transform_2, window_bounds = array<i64: 2, 4, 256>}, {transform_indices = @transform_3, window_bounds = array<i64: 2, 4, 256>}, {transform_indices = @transform_4, window_bounds = array<i64: 2, 4, 256>}]} {
    %c0 = arith.constant 0 : index
    %c0_0 = arith.constant 0 : index
    %0 = vector.load %arg1[%c0, %c0_0] : memref<4x4xf32, #tpu.memory_space<vmem>>, vector<4x4xf32>
    %1 = vector.extract_strided_slice %0 {offsets = [0, 0], sizes = [4, 1], strides = [1, 1]} : vector<4x4xf32> to vector<4x1xf32>
    %2 = vector.shape_cast %1 : vector<4x1xf32> to vector<1x4x1xf32>
    %3 = vector.extract_strided_slice %0 {offsets = [0, 1], sizes = [4, 1], strides = [1, 1]} : vector<4x4xf32> to vector<4x1xf32>
    %4 = vector.shape_cast %3 : vector<4x1xf32> to vector<1x4x1xf32>
    %c0_1 = arith.constant 0 : index
    %c0_2 = arith.constant 0 : index
    %c0_3 = arith.constant 0 : index
    %5 = vector.load %arg2[%c0_1, %c0_2, %c0_3] : memref<2x4x256xf32, #tpu.memory_space<vmem>>, vector<2x4x256xf32>
    %cst = arith.constant dense<0.000000e+00> : vector<4x256xf32>
    %6 = vector.multi_reduction <add>, %5, %cst [0] : vector<2x4x256xf32> to vector<4x256xf32>
    %7 = vector.shape_cast %6 : vector<4x256xf32> to vector<1x4x256xf32>
    %cst_4 = arith.constant dense<0.000000e+00> : vector<1x4xf32>
    %8 = vector.multi_reduction <add>, %7, %cst_4 [2] : vector<1x4x256xf32> to vector<1x4xf32>
    %9 = vector.shape_cast %8 : vector<1x4xf32> to vector<1x4x1xf32>
    %cst_5 = arith.constant 0.001953125 : f32
    %10 = vector.broadcast %cst_5 : f32 to vector<1x4x1xf32>
    %11 = arith.mulf %9, %10 : vector<1x4x1xf32>
    %12 = vector.broadcast %11 : vector<1x4x1xf32> to vector<2x4x256xf32>
    %13 = arith.subf %5, %12 : vector<2x4x256xf32>
    %14 = arith.mulf %13, %13 : vector<2x4x256xf32>
    %cst_6 = arith.constant dense<0.000000e+00> : vector<4x256xf32>
    %15 = vector.multi_reduction <add>, %14, %cst_6 [0] : vector<2x4x256xf32> to vector<4x256xf32>
    %16 = vector.shape_cast %15 : vector<4x256xf32> to vector<1x4x256xf32>
    %cst_7 = arith.constant dense<0.000000e+00> : vector<1x4xf32>
    %17 = vector.multi_reduction <add>, %16, %cst_7 [2] : vector<1x4x256xf32> to vector<1x4xf32>
    %18 = vector.shape_cast %17 : vector<1x4xf32> to vector<1x4x1xf32>
    %cst_8 = arith.constant 0.001953125 : f32
    %19 = vector.broadcast %cst_8 : f32 to vector<1x4x1xf32>
    %20 = arith.mulf %18, %19 : vector<1x4x1xf32>
    %cst_9 = arith.constant 9.99999974E-6 : f32
    %21 = vector.broadcast %cst_9 : f32 to vector<1x4x1xf32>
    %22 = arith.addf %20, %21 : vector<1x4x1xf32>
    %23 = math.rsqrt %22 : vector<1x4x1xf32>
    %24 = arith.mulf %2, %23 : vector<1x4x1xf32>
    %25 = vector.broadcast %24 : vector<1x4x1xf32> to vector<2x4x256xf32>
    %26 = arith.mulf %13, %25 : vector<2x4x256xf32>
    %27 = vector.broadcast %4 : vector<1x4x1xf32> to vector<2x4x256xf32>
    %28 = arith.addf %26, %27 : vector<2x4x256xf32>
    %c0_10 = arith.constant 0 : index
    %c0_11 = arith.constant 0 : index
    %c0_12 = arith.constant 0 : index
    %29 = vector.load %arg4[%c0_10, %c0_11, %c0_12] : memref<2x4x256xf32, #tpu.memory_space<vmem>>, vector<2x4x256xf32>
    tpu.vector_store %arg4[%c0_10, %c0_11, %c0_12], %28 {strides = array<i32>} : memref<2x4x256xf32, #tpu.memory_space<vmem>>, vector<2x4x256xf32>,
    %30 = vector.extract_strided_slice %0 {offsets = [0, 2], sizes = [4, 1], strides = [1, 1]} : vector<4x4xf32> to vector<4x1xf32>
    %31 = vector.shape_cast %30 : vector<4x1xf32> to vector<1x4x1xf32>
    %32 = vector.extract_strided_slice %0 {offsets = [0, 3], sizes = [4, 1], strides = [1, 1]} : vector<4x4xf32> to vector<4x1xf32>
    %33 = vector.shape_cast %32 : vector<4x1xf32> to vector<1x4x1xf32>
    %c0_13 = arith.constant 0 : index
    %c0_14 = arith.constant 0 : index
    %c0_15 = arith.constant 0 : index
    %34 = vector.load %arg3[%c0_13, %c0_14, %c0_15] : memref<2x4x256xf32, #tpu.memory_space<vmem>>, vector<2x4x256xf32>
    %cst_16 = arith.constant dense<0.000000e+00> : vector<4x256xf32>
    %35 = vector.multi_reduction <add>, %34, %cst_16 [0] : vector<2x4x256xf32> to vector<4x256xf32>
    %36 = vector.shape_cast %35 : vector<4x256xf32> to vector<1x4x256xf32>
    %cst_17 = arith.constant dense<0.000000e+00> : vector<1x4xf32>
    %37 = vector.multi_reduction <add>, %36, %cst_17 [2] : vector<1x4x256xf32> to vector<1x4xf32>
    %38 = vector.shape_cast %37 : vector<1x4xf32> to vector<1x4x1xf32>
    %cst_18 = arith.constant 0.001953125 : f32
    %39 = vector.broadcast %cst_18 : f32 to vector<1x4x1xf32>
    %40 = arith.mulf %38, %39 : vector<1x4x1xf32>
    %41 = vector.broadcast %40 : vector<1x4x1xf32> to vector<2x4x256xf32>
    %42 = arith.subf %34, %41 : vector<2x4x256xf32>
    %43 = arith.mulf %42, %42 : vector<2x4x256xf32>
    %cst_19 = arith.constant dense<0.000000e+00> : vector<4x256xf32>
    %44 = vector.multi_reduction <add>, %43, %cst_19 [0] : vector<2x4x256xf32> to vector<4x256xf32>
    %45 = vector.shape_cast %44 : vector<4x256xf32> to vector<1x4x256xf32>
    %cst_20 = arith.constant dense<0.000000e+00> : vector<1x4xf32>
    %46 = vector.multi_reduction <add>, %45, %cst_20 [2] : vector<1x4x256xf32> to vector<1x4xf32>
    %47 = vector.shape_cast %46 : vector<1x4xf32> to vector<1x4x1xf32>
    %cst_21 = arith.constant 0.001953125 : f32
    %48 = vector.broadcast %cst_21 : f32 to vector<1x4x1xf32>
    %49 = arith.mulf %47, %48 : vector<1x4x1xf32>
    %cst_22 = arith.constant 9.99999974E-6 : f32
    %50 = vector.broadcast %cst_22 : f32 to vector<1x4x1xf32>
    %51 = arith.addf %49, %50 : vector<1x4x1xf32>
    %52 = math.rsqrt %51 : vector<1x4x1xf32>
    %53 = arith.mulf %31, %52 : vector<1x4x1xf32>
    %54 = vector.broadcast %53 : vector<1x4x1xf32> to vector<2x4x256xf32>
    %55 = arith.mulf %42, %54 : vector<2x4x256xf32>
    %56 = vector.broadcast %33 : vector<1x4x1xf32> to vector<2x4x256xf32>
    %57 = arith.addf %55, %56 : vector<2x4x256xf32>
    %c0_23 = arith.constant 0 : index
    %c0_24 = arith.constant 0 : index
    %c0_25 = arith.constant 0 : index
    %58 = vector.load %arg5[%c0_23, %c0_24, %c0_25] : memref<2x4x256xf32, #tpu.memory_space<vmem>>, vector<2x4x256xf32>
    tpu.vector_store %arg5[%c0_23, %c0_24, %c0_25], %57 {strides = array<i32>} : memref<2x4x256xf32, #tpu.memory_space<vmem>>, vector<2x4x256xf32>,
    return
  }
  func.func @transform_0(%arg0: i32) -> (i32, i32) {
    %c0_i32 = arith.constant 0 : i32
    %c0_i32_0 = arith.constant 0 : i32
    return %arg0, %c0_i32 : i32, i32
  }
  func.func @transform_1(%arg0: i32) -> (i32, i32, i32) {
    %c0_i32 = arith.constant 0 : i32
    %c0_i32_0 = arith.constant 0 : i32
    %c0_i32_1 = arith.constant 0 : i32
    return %c0_i32, %arg0, %c0_i32_0 : i32, i32, i32
  }
  func.func @transform_2(%arg0: i32) -> (i32, i32, i32) {
    %c0_i32 = arith.constant 0 : i32
    %c0_i32_0 = arith.constant 0 : i32
    %c0_i32_1 = arith.constant 0 : i32
    return %c0_i32, %arg0, %c0_i32_0 : i32, i32, i32
  }
  func.func @transform_3(%arg0: i32) -> (i32, i32, i32) {
    %c0_i32 = arith.constant 0 : i32
    %c0_i32_0 = arith.constant 0 : i32
    %c0_i32_1 = arith.constant 0 : i32
    return %c0_i32, %arg0, %c0_i32_0 : i32, i32, i32
  }
  func.func @transform_4(%arg0: i32) -> (i32, i32, i32) {
    %c0_i32 = arith.constant 0 : i32
    %c0_i32_0 = arith.constant 0 : i32
    %c0_i32_1 = arith.constant 0 : i32
    return %c0_i32, %arg0, %c0_i32_0 : i32, i32, i32
  }
}

</mosaic_0001>

<llo_original>
// kernel: tpu_custom_call.1
$region0: #{tpu_custom_call.1}
  #allocation0 [shape = 'u32[]', space=smem, size = 0x4, offset = 0x4, fixed_abs, tag = 'smem constant byte address 0x4 - core index']
  #allocation1 [shape = 'u32[144,128]{1,0:T(1,128)}', space=vmem, size = 0x12000, scoped, tag = 'internal scratch']
  %s0 = inlined_call_operand.hbm [shape: f32[4,4], index: 0, kind: input, shape index: {}]
  %s1 = inlined_call_operand.hbm [shape: f32[2,4,256], index: 1, kind: input, shape index: {}]
  %s2 = inlined_call_operand.hbm [shape: f32[2,4,256], index: 2, kind: input, shape index: {}]
  %s3 = inlined_call_operand.hbm [shape: f32[2,4,256], index: 3, kind: output, shape index: {0}]
  %s4 = inlined_call_operand.hbm [shape: f32[2,4,256], index: 4, kind: output, shape index: {1}]
  %5 = xla_tuple %s3, %s4
  %s6 = sld [smem:[#allocation0]]
  $region42: #{tpu_custom_call.1} parent=0
    _
  %s8 = ssub.s32 1, %s6
  %s9 = scalar_select 0, %s8, %s6
  $region1: #{tpu_custom_call.1} parent=0
    #allocation2 [shape = 'u8[2048]{0}', space=vmem, size = 0x800, scoped, tag = 'input window, operand 0, single buffered']
    #allocation3 [shape = 's32[1]{0}', space=sflag, size = 0x4, scoped, tag = 'scoped memory for tpu_custom_call.1']
    #allocation4 [shape = 's32[1]{0}', space=sflag, size = 0x4, scoped, tag = 'scoped memory for tpu_custom_call.1']
    #allocation5 [shape = 'u8[8192]{0}', space=vmem, size = 0x2000, scoped, tag = 'input window, operand 1, single buffered']
    #allocation6 [shape = 's32[1]{0}', space=sflag, size = 0x4, scoped, tag = 'scoped memory for tpu_custom_call.1']
    #allocation7 [shape = 'u8[8192]{0}', space=vmem, size = 0x2000, scoped, tag = 'input window, operand 2, single buffered']
    #allocation8 [shape = 'u8[8192]{0}', space=vmem, size = 0x2000, scoped, tag = 'output window, operand 0, single buffered']
    #allocation9 [shape = 'u8[8192]{0}', space=vmem, size = 0x2000, scoped, tag = 'output window, operand 1, single buffered']
    #allocation10 [shape = 's32[1]{0}', space=sflag, size = 0x4, scoped, tag = 'scoped memory for tpu_custom_call.1']
    %10 = vsyncpa [#allocation3], 0
    %11 = vsyncpa [#allocation6], 0
    %12 = vsyncpa [#allocation4], 0
    %13 = vsyncpa [#allocation10], 0
    // Predicated region
    $region2: #{tpu_custom_call.1} parent=1 // pred_check
      _
    $region3: #{tpu_custom_call.1} parent=1 // pred_check_branch
      %15 = sbr.rel (0) target = $region5
    $region4: #{tpu_custom_call.1} parent=1 // pred_region
      %s17 = ssub.s32 64, 64
      %18 = vsyncadd [#allocation3], %s17
      %s20 = sshll.u32 [#allocation2], 4
      %s21 = int_to_ptr.vmem [resolvable:$true] %s20
      %23 = dma.hbm_to_vmem [thread:$0]  %s0, 64, %s21, [#allocation3]
    $region5: #{tpu_custom_call.1} parent=1 // pred_fallthru
      _
    // Predicated region
    $region6: #{tpu_custom_call.1} parent=1 // pred_check
      _
    $region7: #{tpu_custom_call.1} parent=1 // pred_check_branch
      %25 = sbr.rel (0) target = $region9
    $region8: #{tpu_custom_call.1} parent=1 // pred_region
      %s27 = ssub.s32 256, 256
      %28 = vsyncadd [#allocation6], %s27
      %s29 = sshll.u32 [#allocation5], 4
      %s30 = int_to_ptr.vmem [resolvable:$true] %s29
      %35 = dma.hbm_to_vmem [thread:$0]  %s1, 256, %s30, [#allocation6], 128, 128, 8
    $region9: #{tpu_custom_call.1} parent=1 // pred_fallthru
      _
    // Predicated region
    $region10: #{tpu_custom_call.1} parent=1 // pred_check
      _
    $region11: #{tpu_custom_call.1} parent=1 // pred_check_branch
      %37 = sbr.rel (0) target = $region13
    $region12: #{tpu_custom_call.1} parent=1 // pred_region
      %s39 = ssub.s32 256, 256
      %40 = vsyncadd [#allocation6], %s39
      %s41 = sshll.u32 [#allocation7], 4
      %s42 = int_to_ptr.vmem [resolvable:$true] %s41
      %47 = dma.hbm_to_vmem [thread:$0]  %s2, 256, %s42, [#allocation6], 128, 128, 8
    $region13: #{tpu_custom_call.1} parent=1 // pred_fallthru
      _
    // Predicated region
    $region14: #{tpu_custom_call.1} parent=1 // pred_check
      _
    $region15: #{tpu_custom_call.1} parent=1 // pred_check_branch
      %49 = sbr.rel (0) target = $region17
    $region16: #{tpu_custom_call.1} parent=1 // pred_region
      %50 = dma.done [#allocation3], 64
    $region17: #{tpu_custom_call.1} parent=1 // pred_fallthru
      _
    // Predicated region
    $region18: #{tpu_custom_call.1} parent=1 // pred_check
      _
    $region19: #{tpu_custom_call.1} parent=1 // pred_check_branch
      %52 = sbr.rel (0) target = $region21
    $region20: #{tpu_custom_call.1} parent=1 // pred_region
      %53 = dma.done [#allocation6], 256
    $region21: #{tpu_custom_call.1} parent=1 // pred_fallthru
      _
    // Predicated region
    $region22: #{tpu_custom_call.1} parent=1 // pred_check
      _
    $region23: #{tpu_custom_call.1} parent=1 // pred_check_branch
      %55 = sbr.rel (0) target = $region25
    $region24: #{tpu_custom_call.1} parent=1 // pred_region
      %56 = dma.done [#allocation6], 256
    $region25: #{tpu_custom_call.1} parent=1 // pred_fallthru
      _
    %v57 = vld [vmem:[#allocation2] sm:$0xf]
    %v58 = vld [vmem:[#allocation5] sm:$0xff]
    %v59 = vld [vmem:[#allocation5 + $0x8] sm:$0xff]
    %v62 = vcombine.high %v58, %v58
    %v63 = vcombine.high %v59, %v59
    %vm66 = vcmask 1043456
    %v67 = vsel %vm66, %v58, 0.0
    %v68 = vsel %vm66, %v59, 0.0
    %v69 = vadd.f32 %v67, %v68
    %v70 = vsel %vm66, %v62, 0.0
    %v71 = vsel %vm66, %v63, 0.0
    %v72 = vadd.f32 %v70, %v71
    %v73 = vsel %vm66, %v69, 0.0
    %v74 = vsel %vm66, %v72, 0.0
    %v75 = vadd.f32 %v73, %v74
    %76 = vadd.xlane.f32.xlu0 %v75
    %v77 = vpop.xlane.xlu0 %76
    %v78 = vmul.f32 %v77, 0.001953125
    %v81 = vunpack.c.l.s4 839922192
    %v82 = vunpack.c.0.s8 %v81
    %v83 = vlaneseq
    %v84 = vshrl.u32 %v83, 7
    %v85 = vsub.s32 %v82, %v84
    %v86 = vrot.slane %v78, %v85
    %v88 = vsub.f32 %v58, %v86
    %v89 = vsub.f32 %v59, %v86
    %v90 = vmul.f32 %v88, %v88
    %v91 = vmul.f32 %v89, %v89
    %v94 = vcombine.high %v90, %v90
    %v95 = vcombine.high %v91, %v91
    %v98 = vsel %vm66, %v90, 0.0
    %v99 = vsel %vm66, %v91, 0.0
    %v100 = vadd.f32 %v98, %v99
    %v101 = vsel %vm66, %v94, 0.0
    %v102 = vsel %vm66, %v95, 0.0
    %v103 = vadd.f32 %v101, %v102
    %v104 = vsel %vm66, %v100, 0.0
    %v105 = vsel %vm66, %v103, 0.0
    %v106 = vadd.f32 %v104, %v105
    %107 = vadd.xlane.f32.xlu0 %v106
    %v108 = vpop.xlane.xlu0 %107
    %v109 = vmul.f32 %v108, 0.001953125
    %v110 = vadd.f32 %v109, 1e-05
    %v111 = vrsqrt.pop %v110
    %v112 = vmul.f32 %v57, %v111
    %114 = vset.pattern.permute.xlu0 0
    %115 = vperm.xlu0 %114, %v112
    %v116 = vpop.permute.xlu0 %115
    %v118 = vunpack.c.l.s4 839922192
    %v119 = vunpack.c.0.s8 %v118
    %v120 = vlaneseq
    %v121 = vshrl.u32 %v120, 7
    %v122 = vsub.s32 %v119, %v121
    %v123 = vrot.slane %v116, %v122
    %v125 = vmul.f32 %v88, %v123
    %v126 = vmul.f32 %v89, %v123
    %128 = vset.pattern.permute.xlu0 1
    %129 = vperm.xlu0 %128, %v57
    %v130 = vpop.permute.xlu0 %129
    %v132 = vunpack.c.l.s4 839922192
    %v133 = vunpack.c.0.s8 %v132
    %v134 = vlaneseq
    %v135 = vshrl.u32 %v134, 7
    %v136 = vsub.s32 %v133, %v135
    %v137 = vrot.slane %v130, %v136
    %v139 = vadd.f32 %v125, %v137
    %v140 = vadd.f32 %v126, %v137
    %141 = vst [vmem:[#allocation8] sm:$0xff] %v139
    %142 = vst [vmem:[#allocation8 + $0x8] sm:$0xff] %v140
    %v143 = vld [vmem:[#allocation7] sm:$0xff]
    %v144 = vld [vmem:[#allocation7 + $0x8] sm:$0xff]
    %v147 = vcombine.high %v143, %v143
    %v148 = vcombine.high %v144, %v144
    %v151 = vsel %vm66, %v143, 0.0
    %v152 = vsel %vm66, %v144, 0.0
    %v153 = vadd.f32 %v151, %v152
    %v154 = vsel %vm66, %v147, 0.0
    %v155 = vsel %vm66, %v148, 0.0
    %v156 = vadd.f32 %v154, %v155
    %v157 = vsel %vm66, %v153, 0.0
    %v158 = vsel %vm66, %v156, 0.0
    %v159 = vadd.f32 %v157, %v158
    %160 = vadd.xlane.f32.xlu0 %v159
    %v161 = vpop.xlane.xlu0 %160
    %v162 = vmul.f32 %v161, 0.001953125
    %v165 = vunpack.c.l.s4 839922192
    %v166 = vunpack.c.0.s8 %v165
    %v167 = vlaneseq
    %v168 = vshrl.u32 %v167, 7
    %v169 = vsub.s32 %v166, %v168
    %v170 = vrot.slane %v162, %v169
    %v172 = vsub.f32 %v143, %v170
    %v173 = vsub.f32 %v144, %v170
    %v174 = vmul.f32 %v172, %v172
    %v175 = vmul.f32 %v173, %v173
    %v178 = vcombine.high %v174, %v174
    %v179 = vcombine.high %v175, %v175
    %v182 = vsel %vm66, %v174, 0.0
    %v183 = vsel %vm66, %v175, 0.0
    %v184 = vadd.f32 %v182, %v183
    %v185 = vsel %vm66, %v178, 0.0
    %v186 = vsel %vm66, %v179, 0.0
    %v187 = vadd.f32 %v185, %v186
    %v188 = vsel %vm66, %v184, 0.0
    %v189 = vsel %vm66, %v187, 0.0
    %v190 = vadd.f32 %v188, %v189
    %191 = vadd.xlane.f32.xlu0 %v190
    %v192 = vpop.xlane.xlu0 %191
    %v193 = vmul.f32 %v192, 0.001953125
    %v194 = vadd.f32 %v193, 1e-05
    %v195 = vrsqrt.pop %v194
    %v196 = vmul.f32 %v57, %v195
    %198 = vset.pattern.permute.xlu0 2
    %199 = vperm.xlu0 %198, %v196
    %v200 = vpop.permute.xlu0 %199
    %v202 = vunpack.c.l.s4 839922192
    %v203 = vunpack.c.0.s8 %v202
    %v204 = vlaneseq
    %v205 = vshrl.u32 %v204, 7
    %v206 = vsub.s32 %v203, %v205
    %v207 = vrot.slane %v200, %v206
    %v209 = vmul.f32 %v172, %v207
    %v210 = vmul.f32 %v173, %v207
    %211 = vset.pattern.permute.xlu0 3
    %212 = vperm.xlu0 %211, %v57
    %v213 = vpop.permute.xlu0 %212
    %v215 = vunpack.c.l.s4 839922192
    %v216 = vunpack.c.0.s8 %v215
    %v217 = vlaneseq
    %v218 = vshrl.u32 %v217, 7
    %v219 = vsub.s32 %v216, %v218
    %v220 = vrot.slane %v213, %v219
    %v222 = vadd.f32 %v209, %v220
    %v223 = vadd.f32 %v210, %v220
    %224 = vst [vmem:[#allocation9] sm:$0xff] %v222
    %225 = vst [vmem:[#allocation9 + $0x8] sm:$0xff] %v223
    // Predicated region
    $region26: #{tpu_custom_call.1} parent=1 // pred_check
      _
    $region27: #{tpu_custom_call.1} parent=1 // pred_check_branch
      %227 = sbr.rel (0) target = $region29
    $region28: #{tpu_custom_call.1} parent=1 // pred_region
      %s229 = ssub.s32 256, 256
      %230 = vsyncadd [#allocation4], %s229
      %s231 = sshll.u32 [#allocation8], 4
      %s232 = int_to_ptr.vmem [resolvable:$true] %s231
      %237 = dma.vmem_to_hbm [thread:$0]  %s232, 256, %s3, [#allocation4], 128, 128, 8
    $region29: #{tpu_custom_call.1} parent=1 // pred_fallthru
      _
    // Predicated region
    $region30: #{tpu_custom_call.1} parent=1 // pred_check
      _
    $region31: #{tpu_custom_call.1} parent=1 // pred_check_branch
      %239 = sbr.rel (0) target = $region33
    $region32: #{tpu_custom_call.1} parent=1 // pred_region
      %s241 = ssub.s32 256, 256
      %242 = vsyncadd [#allocation10], %s241
      %s243 = sshll.u32 [#allocation9], 4
      %s244 = int_to_ptr.vmem [resolvable:$true] %s243
      %249 = dma.vmem_to_hbm [thread:$0]  %s244, 256, %s4, [#allocation10], 128, 128, 8
    $region33: #{tpu_custom_call.1} parent=1 // pred_fallthru
      _
    // Predicated region
    $region34: #{tpu_custom_call.1} parent=1 // pred_check
      _
    $region35: #{tpu_custom_call.1} parent=1 // pred_check_branch
      %251 = sbr.rel (0) target = $region37
    $region36: #{tpu_custom_call.1} parent=1 // pred_region
      %252 = dma.done [#allocation4], 256
    $region37: #{tpu_custom_call.1} parent=1 // pred_fallthru
      _
    // Predicated region
    $region38: #{tpu_custom_call.1} parent=1 // pred_check
      _
    $region39: #{tpu_custom_call.1} parent=1 // pred_check_branch
      %254 = sbr.rel (0) target = $region41
    $region40: #{tpu_custom_call.1} parent=1 // pred_region
      %255 = dma.done [#allocation10], 256
    $region41: #{tpu_custom_call.1} parent=1 // pred_fallthru
      _
    %256 = vsyncpa [#allocation3], 1
    %257 = vsyncpa [#allocation6], 1
    %258 = vsyncpa [#allocation4], 1
    %259 = vsyncpa [#allocation10], 1

</llo_original>
